<compile_context>
chip_gen: v5e
topology: v5e:2x2
jax: 0.10.0
libtpu: 0.0.40
codegen_flags: <defaults>
</compile_context>

<pallas_src>
import functools

import jax
import jax.numpy as jnp
import numpy as np
from jax.experimental import pallas as pl
from jax.experimental.pallas import tpu as pltpu

OUTPUT_DIM = 128
BN_EPS = 1e-5


def _tpu_generation():
    """Best-effort TPU generation detection (used only for tuning knobs)."""
    try:
        kind = jax.devices()[0].device_kind.lower()
    except Exception:
        return 6
    for gen, toks in ((7, ("v7",)), (6, ("v6", "trillium")), (5, ("v5",)),
                      (4, ("v4",)), (3, ("v3",))):
        if any(t in kind for t in toks):
            return gen
    return 6


# --------------------------------------------------------------------------
# Parameter construction (deterministic, folds eval-mode BatchNorm into the
# preceding conv / linear layer:  y = (x@W + b) * s + t  ==  x@(W*s) + (b*s+t))
# --------------------------------------------------------------------------
def _fold_bn(w, b, gamma, beta, mean, var, eps=BN_EPS):
    scale = gamma / jnp.sqrt(var + eps)          # (Cout,)
    w_f = w * scale[None, :]                     # (Cin, Cout)
    b_f = b * scale + (beta - mean * scale)      # (Cout,)
    return w_f, b_f.reshape(1, -1)               # bias kept 2-D (1, Cout)


def init_params():
    key = jax.random.PRNGKey(42)
    ks = jax.random.split(key, 9)

    def dense(k, cin, cout):
        bound = 1.0 / np.sqrt(cin)
        kw, kb = jax.random.split(k)
        w = jax.random.uniform(kw, (cin, cout), jnp.float32, -bound, bound)
        b = jax.random.uniform(kb, (cout,), jnp.float32, -bound, bound)
        return w, b

    def bn(k, c):
        k1, k2, k3, k4 = jax.random.split(k, 4)
        gamma = 1.0 + 0.1 * jax.random.normal(k1, (c,), jnp.float32)
        beta = 0.1 * jax.random.normal(k2, (c,), jnp.float32)
        mean = 0.05 * jax.random.normal(k3, (c,), jnp.float32)
        var = jnp.abs(1.0 + 0.1 * jax.random.normal(k4, (c,), jnp.float32))
        return gamma, beta, mean, var

    w1, b1 = dense(ks[0], 3, 64)
    w2, b2 = dense(ks[1], 64, 128)
    w3, b3 = dense(ks[2], 128, 256)
    wf1, bf1 = dense(ks[3], 256, 512)
    wf2, bf2 = dense(ks[4], 512, OUTPUT_DIM)

    w1, b1 = _fold_bn(w1, b1, *bn(ks[5], 64))
    w2, b2 = _fold_bn(w2, b2, *bn(ks[6], 128))
    w3, b3 = _fold_bn(w3, b3, *bn(ks[7], 256))
    wf1, bf1 = _fold_bn(wf1, bf1, *bn(ks[8], 512))
    bf2 = bf2.reshape(1, -1)

    return dict(w1=w1, b1=b1, w2=w2, b2=b2, w3=w3, b3=b3,
                wf1=wf1, bf1=bf1, wf2=wf2, bf2=bf2)


# --------------------------------------------------------------------------
# Layout handling (mirrors the PyTorch heuristic exactly; explicit flag
# available to disambiguate the (B, 3, 3) case).
# --------------------------------------------------------------------------
def _prep_input(x, channels_last=None):
    x = jnp.asarray(x, jnp.float32)
    if x.ndim == 2:                           # (N, 3) -> (1, N, 3)
        x = x[None]
    if channels_last is None:
        # PyTorch: "if x.shape[1] != 3: transpose"  => shape[1]==3 means (B,3,N)
        channels_last = (x.shape[1] != 3)
    if not channels_last:                     # (B, 3, N) -> (B, N, 3)
        x = jnp.transpose(x, (0, 2, 1))
    return x


# --------------------------------------------------------------------------
# Kernel 1: per-point MLP + running global max-pool.
#   grid = (B, n_split, tiles_per_split); x tile (TILE_N, 3); pooled_ref
#   (1, 256) acts as the running-max accumulator (output block revisited
#   across the tile axis).
# --------------------------------------------------------------------------
def point_mlp_kernel(x_ref, w1_ref, b1_ref, w2_ref, b2_ref, w3_ref, b3_ref,
                     pooled_ref, *, n_points, tile_n, tiles_per_split,
                     has_padding, conv1_on_mxu):
    s = pl.program_id(1)
    k = pl.program_id(2)

    @pl.when(k == 0)
    def _init():
        pooled_ref[...] = jnp.full(pooled_ref.shape, -jnp.inf, jnp.float32)

    x = x_ref[...]                                   # (tile_n, 3) f32

    if conv1_on_mxu:
        # v6e/v7x: K=3 matmul on the MXU (MXU has slack; keeps the
        # (tile_n,1)->(tile_n,64) broadcast-MAC chain off the binding VALU).
        h = jnp.dot(x.astype(jnp.bfloat16), w1_ref[...],
                    preferred_element_type=jnp.float32) + b1_ref[...]
    else:
        # v5e: MXU is the (co-)binding unit -> keep conv1 on the VPU in f32.
        w1 = w1_ref[...]                             # (3, 64) f32
        h = (x[:, 0:1] * w1[0:1, :] + x[:, 1:2] * w1[1:2, :]
             + x[:, 2:3] * w1[2:3, :] + b1_ref[...])
    a1 = jnp.maximum(h, 0.0).astype(jnp.bfloat16)    # fused ReLU + downcast

    # conv2 + folded BN2 + ReLU: bf16 MXU inputs, f32 accumulation.
    h = jnp.dot(a1, w2_ref[...], preferred_element_type=jnp.float32) + b2_ref[...]
    a2 = jnp.maximum(h, 0.0).astype(jnp.bfloat16)

    # conv3 + folded BN3 + ReLU.
    h = jnp.dot(a2, w3_ref[...], preferred_element_type=jnp.float32) + b3_ref[...]
    h = jnp.maximum(h, 0.0)                          # (tile_n, 256) f32

    def update(block):
        # Running global max-pool over points (torch.max(x, 2)[0]).
        pooled_ref[...] = jnp.maximum(pooled_ref[...],
                                      jnp.max(block, axis=0, keepdims=True))

    if has_padding:
        gt = s * tiles_per_split + k                 # global tile index
        needs_mask = (gt + 1) * tile_n > n_points    # only tiles with pad rows

        @pl.when(needs_mask)
        def _masked():
            row = (jax.lax.broadcasted_iota(jnp.int32, (tile_n, 1), 0)
                   + gt * tile_n)
            update(jnp.where(row < n_points, h, -jnp.inf))

        @pl.when(jnp.logical_not(needs_mask))
        def _plain():
            update(h)
    else:
        update(h)


# --------------------------------------------------------------------------
# Kernel 2: batched FC head (pooled (B,256) -> fc1 -> ReLU -> fc2 -> (B,128)).
# Only used for B >= 128; dropout is identity at inference.
# --------------------------------------------------------------------------
def fc_head_kernel(p_ref, wf1_ref, bf1_ref, wf2_ref, bf2_ref, o_ref):
    g = jnp.dot(p_ref[...].astype(jnp.bfloat16), wf1_ref[...],
                preferred_element_type=jnp.float32) + bf1_ref[...]
    g = jnp.maximum(g, 0.0).astype(jnp.bfloat16)
    o_ref[...] = jnp.dot(g, wf2_ref[...],
                         preferred_element_type=jnp.float32) + bf2_ref[...]


# --------------------------------------------------------------------------
# Wrapper
# --------------------------------------------------------------------------
def efficient_point_encoder(x, params, channels_last=None):
    gen = _tpu_generation()
    x = _prep_input(x, channels_last)
    B, N, C = x.shape
    assert C == 3

    conv1_on_mxu = gen >= 6
    # v5e scoped-VMEM default is 16 MiB -> cap the tile there; v6e/v7x (32 MiB
    # scoped default) comfortably fit 4096-point tiles (~13 MiB working set).
    tile_cap = 4096 if gen >= 6 else 2048

    tile_n = min(tile_cap, max(8, ((N + 7) // 8) * 8))
    n_tiles = (N + tile_n - 1) // tile_n

    # v7x has 2 TensorCores/chip; with B == 1 the batch 'parallel' axis cannot
    # feed both cores, so split the tile axis 2-way into independent partial
    # maxes (combined below).  No-op elsewhere.
    n_split = 2 if (gen >= 7 and B == 1 and n_tiles >= 2) else 1
    tiles_per_split = (n_tiles + n_split - 1) // n_split
    total_tiles = n_split * tiles_per_split
    n_pad = total_tiles * tile_n
    has_padding = (n_pad != N)
    if has_padding:
        x = jnp.pad(x, ((0, 0), (0, n_pad - N), (0, 0)))

    # conv weights: w2/w3 (and w1 when it runs on the MXU) as bf16, biases f32.
    w1 = params["w1"].astype(jnp.bfloat16) if conv1_on_mxu else params["w1"]
    b1 = params["b1"]
    w2, b2 = params["w2"].astype(jnp.bfloat16), params["b2"]
    w3, b3 = params["w3"].astype(jnp.bfloat16), params["b3"]
    conv_weights = [w1, b1, w2, b2, w3, b3]

    def weight_spec(a):
        return pl.BlockSpec(a.shape, lambda b, s, k, _nd=a.ndim: (0,) * _nd)

    flops = 2 * B * N * (3 * 64 + 64 * 128 + 128 * 256)
    bytes_accessed = int(
        x.size * 4
        + sum(int(w.size) * w.dtype.itemsize for w in conv_weights)
        + B * n_split * 256 * 4)

    kernel = functools.partial(
        point_mlp_kernel, n_points=N, tile_n=tile_n,
        tiles_per_split=tiles_per_split, has_padding=has_padding,
        conv1_on_mxu=conv1_on_mxu)

    pooled = pl.pallas_call(
        kernel,
        out_shape=jax.ShapeDtypeStruct((B * n_split, 1, 256), jnp.float32),
        grid=(B, n_split, tiles_per_split),
        in_specs=[pl.BlockSpec((None, tile_n, 3),
                               lambda b, s, k: (b, s * tiles_per_split + k, 0))]
                 + [weight_spec(w) for w in conv_weights],
        out_specs=pl.BlockSpec((None, 1, 256),
                               lambda b, s, k: (b * n_split + s, 0, 0)),
        compiler_params=pltpu.CompilerParams(
            dimension_semantics=("parallel", "parallel", "arbitrary")),
        cost_estimate=pl.CostEstimate(flops=flops, transcendentals=0,
                                      bytes_accessed=bytes_accessed),
    )(x, *conv_weights)

    # Combine the per-split partial maxes -> (B, 256).
    pooled = jnp.max(pooled.reshape(B, n_split, 256), axis=1)

    # FC head.  For small B a second pallas_call only adds launch + weight-DMA
    # overhead; XLA fuses this tiny head fine.
    if B < 128:
        g = jnp.maximum(pooled @ params["wf1"] + params["bf1"], 0.0)
        return g @ params["wf2"] + params["bf2"]

    tb = 128
    bp = ((B + tb - 1) // tb) * tb
    p_pad = jnp.pad(pooled, ((0, bp - B), (0, 0))) if bp != B else pooled
    out = pl.pallas_call(
        fc_head_kernel,
        out_shape=jax.ShapeDtypeStruct((bp, OUTPUT_DIM), jnp.float32),
        grid=(bp // tb,),
        in_specs=[pl.BlockSpec((tb, 256), lambda i: (i, 0)),
                  pl.BlockSpec((256, 512), lambda i: (0, 0)),
                  pl.BlockSpec((1, 512), lambda i: (0, 0)),
                  pl.BlockSpec((512, OUTPUT_DIM), lambda i: (0, 0)),
                  pl.BlockSpec((1, OUTPUT_DIM), lambda i: (0, 0))],
        out_specs=pl.BlockSpec((tb, OUTPUT_DIM), lambda i: (i, 0)),
        compiler_params=pltpu.CompilerParams(
            dimension_semantics=("parallel",)),
    )(p_pad, params["wf1"].astype(jnp.bfloat16), params["bf1"],
      params["wf2"].astype(jnp.bfloat16), params["bf2"])
    return out[:B]


# --------------------------------------------------------------------------
# Pure-JAX f32 reference (same folded parameters) for correctness check.
# --------------------------------------------------------------------------
def reference(x, params, channels_last=None):
    x = _prep_input(x, channels_last)
    h = jax.nn.relu(x @ params["w1"] + params["b1"])
    h = jax.nn.relu(h @ params["w2"] + params["b2"])
    h = jax.nn.relu(h @ params["w3"] + params["b3"])
    p = jnp.max(h, axis=1)
    g = jax.nn.relu(p @ params["wf1"] + params["bf1"])
    return g @ params["wf2"] + params["bf2"]


if __name__ == "__main__":
    params = init_params()

    # Test 1: small channels-last cloud (B=2, N=16): single full tile, no
    # padding mask, jnp FC head.
    x1 = jax.random.normal(jax.random.PRNGKey(0), (2, 16, 3), jnp.float32)
    out1 = jax.block_until_ready(efficient_point_encoder(x1, params))
    ref1 = jax.block_until_ready(reference(x1, params))
    # Tolerance loosened vs the f32 reference because the convs use bf16 MXU
    # inputs with f32 accumulation (intentional; observed error ~1e-3).
    np.testing.assert_allclose(np.asarray(out1), np.asarray(ref1),
                               rtol=2e-2, atol=2e-2)
    assert out1.shape == (2, OUTPUT_DIM)

    # Test 2: channels-first input (B=256, 3, N=50) like the torch layout —
    # exercises the gated padding mask (50 -> 56) and the Pallas FC head.
    x2 = jax.random.normal(jax.random.PRNGKey(1), (256, 3, 50), jnp.float32)
    out2 = jax.block_until_ready(efficient_point_encoder(x2, params))
    ref2 = jax.block_until_ready(reference(x2, params))
    np.testing.assert_allclose(np.asarray(out2), np.asarray(ref2),
                               rtol=2e-2, atol=2e-2)
    assert out2.shape == (256, OUTPUT_DIM)

    print("KERNEL_OK")
</pallas_src>

<mosaic_0001>
module attributes {stable_mosaic.version = 11 : i64} {
  func.func @point_mlp_kernel(%arg0: i32, %arg1: i32, %arg2: i32, %arg3: memref<1x16x3xf32, #tpu.memory_space<vmem>>, %arg4: memref<3x64xbf16, #tpu.memory_space<vmem>>, %arg5: memref<1x64xf32, #tpu.memory_space<vmem>>, %arg6: memref<64x128xbf16, #tpu.memory_space<vmem>>, %arg7: memref<1x128xf32, #tpu.memory_space<vmem>>, %arg8: memref<128x256xbf16, #tpu.memory_space<vmem>>, %arg9: memref<1x256xf32, #tpu.memory_space<vmem>>, %arg10: memref<1x1x256xf32, #tpu.memory_space<vmem>>) attributes {dimension_semantics = [#tpu.dimension_semantics<parallel>, #tpu.dimension_semantics<parallel>, #tpu.dimension_semantics<arbitrary>], iteration_bounds = array<i64: 2, 1, 1>, scalar_prefetch = 0 : i64, scratch_operands = 0 : i64, tpu.core_type = #tpu.core_type<tc>, window_params = [{transform_indices = @transform_0, window_bounds = array<i64: 1, 16, 3>}, {pipeline_mode = #tpu.pipeline_mode<synchronous>, transform_indices = @transform_1, window_bounds = array<i64: 3, 64>}, {pipeline_mode = #tpu.pipeline_mode<synchronous>, transform_indices = @transform_2, window_bounds = array<i64: 1, 64>}, {pipeline_mode = #tpu.pipeline_mode<synchronous>, transform_indices = @transform_3, window_bounds = array<i64: 64, 128>}, {pipeline_mode = #tpu.pipeline_mode<synchronous>, transform_indices = @transform_4, window_bounds = array<i64: 1, 128>}, {pipeline_mode = #tpu.pipeline_mode<synchronous>, transform_indices = @transform_5, window_bounds = array<i64: 128, 256>}, {pipeline_mode = #tpu.pipeline_mode<synchronous>, transform_indices = @transform_6, window_bounds = array<i64: 1, 256>}, {transform_indices = @transform_7, window_bounds = array<i64: 1, 1, 256>}]} {
    %c0_i32 = arith.constant 0 : i32
    %0 = arith.cmpi eq, %arg2, %c0_i32 : i32
    %1 = arith.extui %0 : i1 to i32
    %c0_i32_0 = arith.constant 0 : i32
    %2 = arith.cmpi ne, %1, %c0_i32_0 : i32
    scf.if %2 {
      %cst_27 = arith.constant 0xFF800000 : f32
      %37 = vector.broadcast %cst_27 : f32 to vector<1x256xf32>
      %c0_28 = arith.constant 0 : index
      %c0_29 = arith.constant 0 : index
      %c0_30 = arith.constant 0 : index
      %38 = vector.load %arg10[%c0_28, %c0_29, %c0_30] : memref<1x1x256xf32, #tpu.memory_space<vmem>>, vector<1x1x256xf32>
      %39 = vector.shape_cast %38 : vector<1x1x256xf32> to vector<1x256xf32>
      %40 = vector.shape_cast %37 : vector<1x256xf32> to vector<1x1x256xf32>
      tpu.vector_store %arg10[%c0_28, %c0_29, %c0_30], %40 {strides = array<i32>} : memref<1x1x256xf32, #tpu.memory_space<vmem>>, vector<1x1x256xf32>,
    } else {
    }
    %c0 = arith.constant 0 : index
    %c0_1 = arith.constant 0 : index
    %c0_2 = arith.constant 0 : index
    %3 = vector.load %arg3[%c0, %c0_1, %c0_2] : memref<1x16x3xf32, #tpu.memory_space<vmem>>, vector<1x16x3xf32>
    %4 = vector.shape_cast %3 : vector<1x16x3xf32> to vector<16x3xf32>
    %5 = arith.truncf %4 : vector<16x3xf32> to vector<16x3xbf16>
    %c0_3 = arith.constant 0 : index
    %c0_4 = arith.constant 0 : index
    %6 = vector.load %arg4[%c0_3, %c0_4] : memref<3x64xbf16, #tpu.memory_space<vmem>>, vector<3x64xbf16>
    %cst = arith.constant dense<0.000000e+00> : vector<16x64xf32>
    %7 = tpu.matmul %5, %6, %cst {dimension_numbers = #tpu.dot_dimension_numbers<[1], [0], [0], [1], [0, 0, 1, 1], [], []>} : vector<16x3xbf16>, vector<3x64xbf16>, vector<16x64xf32> -> vector<16x64xf32>
    %c0_5 = arith.constant 0 : index
    %c0_6 = arith.constant 0 : index
    %8 = vector.load %arg5[%c0_5, %c0_6] : memref<1x64xf32, #tpu.memory_space<vmem>>, vector<1x64xf32>
    %9 = vector.broadcast %8 : vector<1x64xf32> to vector<16x64xf32>
    %10 = arith.addf %7, %9 : vector<16x64xf32>
    %cst_7 = arith.constant 0.000000e+00 : f32
    %11 = vector.broadcast %cst_7 : f32 to vector<16x64xf32>
    %12 = arith.maximumf %10, %11 : vector<16x64xf32>
    %13 = arith.truncf %12 : vector<16x64xf32> to vector<16x64xbf16>
    %c0_8 = arith.constant 0 : index
    %c0_9 = arith.constant 0 : index
    %14 = vector.load %arg6[%c0_8, %c0_9] : memref<64x128xbf16, #tpu.memory_space<vmem>>, vector<64x128xbf16>
    %cst_10 = arith.constant dense<0.000000e+00> : vector<16x128xf32>
    %15 = tpu.matmul %13, %14, %cst_10 {dimension_numbers = #tpu.dot_dimension_numbers<[1], [0], [0], [1], [0, 0, 1, 1], [], []>} : vector<16x64xbf16>, vector<64x128xbf16>, vector<16x128xf32> -> vector<16x128xf32>
    %c0_11 = arith.constant 0 : index
    %c0_12 = arith.constant 0 : index
    %16 = vector.load %arg7[%c0_11, %c0_12] : memref<1x128xf32, #tpu.memory_space<vmem>>, vector<1x128xf32>
    %17 = vector.broadcast %16 : vector<1x128xf32> to vector<16x128xf32>
    %18 = arith.addf %15, %17 : vector<16x128xf32>
    %cst_13 = arith.constant 0.000000e+00 : f32
    %19 = vector.broadcast %cst_13 : f32 to vector<16x128xf32>
    %20 = arith.maximumf %18, %19 : vector<16x128xf32>
    %21 = arith.truncf %20 : vector<16x128xf32> to vector<16x128xbf16>
    %c0_14 = arith.constant 0 : index
    %c0_15 = arith.constant 0 : index
    %22 = vector.load %arg8[%c0_14, %c0_15] : memref<128x256xbf16, #tpu.memory_space<vmem>>, vector<128x256xbf16>
    %cst_16 = arith.constant dense<0.000000e+00> : vector<16x256xf32>
    %23 = tpu.matmul %21, %22, %cst_16 {dimension_numbers = #tpu.dot_dimension_numbers<[1], [0], [0], [1], [0, 0, 1, 1], [], []>} : vector<16x128xbf16>, vector<128x256xbf16>, vector<16x256xf32> -> vector<16x256xf32>
    %c0_17 = arith.constant 0 : index
    %c0_18 = arith.constant 0 : index
    %24 = vector.load %arg9[%c0_17, %c0_18] : memref<1x256xf32, #tpu.memory_space<vmem>>, vector<1x256xf32>
    %25 = vector.broadcast %24 : vector<1x256xf32> to vector<16x256xf32>
    %26 = arith.addf %23, %25 : vector<16x256xf32>
    %cst_19 = arith.constant 0.000000e+00 : f32
    %27 = vector.broadcast %cst_19 : f32 to vector<16x256xf32>
    %28 = arith.maximumf %26, %27 : vector<16x256xf32>
    %c0_20 = arith.constant 0 : index
    %c0_21 = arith.constant 0 : index
    %c0_22 = arith.constant 0 : index
    %29 = vector.load %arg10[%c0_20, %c0_21, %c0_22] : memref<1x1x256xf32, #tpu.memory_space<vmem>>, vector<1x1x256xf32>
    %30 = vector.shape_cast %29 : vector<1x1x256xf32> to vector<1x256xf32>
    %cst_23 = arith.constant dense<0xFF800000> : vector<256xf32>
    %31 = vector.multi_reduction <maximumf>, %28, %cst_23 [0] : vector<16x256xf32> to vector<256xf32>
    %32 = vector.shape_cast %31 : vector<256xf32> to vector<1x256xf32>
    %33 = arith.maximumf %30, %32 : vector<1x256xf32>
    %c0_24 = arith.constant 0 : index
    %c0_25 = arith.constant 0 : index
    %c0_26 = arith.constant 0 : index
    %34 = vector.load %arg10[%c0_24, %c0_25, %c0_26] : memref<1x1x256xf32, #tpu.memory_space<vmem>>, vector<1x1x256xf32>
    %35 = vector.shape_cast %34 : vector<1x1x256xf32> to vector<1x256xf32>
    %36 = vector.shape_cast %33 : vector<1x256xf32> to vector<1x1x256xf32>
    tpu.vector_store %arg10[%c0_24, %c0_25, %c0_26], %36 {strides = array<i32>} : memref<1x1x256xf32, #tpu.memory_space<vmem>>, vector<1x1x256xf32>,
    return
  }
  func.func @transform_0(%arg0: i32, %arg1: i32, %arg2: i32) -> (i32, i32, i32) {
    %c1_i32 = arith.constant 1 : i32
    %0 = arith.muli %arg1, %c1_i32 : i32
    %1 = arith.addi %0, %arg2 : i32
    %c0_i32 = arith.constant 0 : i32
    %c0_i32_0 = arith.constant 0 : i32
    return %arg0, %1, %c0_i32 : i32, i32, i32
  }
  func.func @transform_1(%arg0: i32, %arg1: i32, %arg2: i32) -> (i32, i32) {
    %c0_i32 = arith.constant 0 : i32
    %c0_i32_0 = arith.constant 0 : i32
    %c0_i32_1 = arith.constant 0 : i32
    return %c0_i32, %c0_i32_0 : i32, i32
  }
  func.func @transform_2(%arg0: i32, %arg1: i32, %arg2: i32) -> (i32, i32) {
    %c0_i32 = arith.constant 0 : i32
    %c0_i32_0 = arith.constant 0 : i32
    %c0_i32_1 = arith.constant 0 : i32
    return %c0_i32, %c0_i32_0 : i32, i32
  }
  func.func @transform_3(%arg0: i32, %arg1: i32, %arg2: i32) -> (i32, i32) {
    %c0_i32 = arith.constant 0 : i32
    %c0_i32_0 = arith.constant 0 : i32
    %c0_i32_1 = arith.constant 0 : i32
    return %c0_i32, %c0_i32_0 : i32, i32
  }
  func.func @transform_4(%arg0: i32, %arg1: i32, %arg2: i32) -> (i32, i32) {
    %c0_i32 = arith.constant 0 : i32
    %c0_i32_0 = arith.constant 0 : i32
    %c0_i32_1 = arith.constant 0 : i32
    return %c0_i32, %c0_i32_0 : i32, i32
  }
  func.func @transform_5(%arg0: i32, %arg1: i32, %arg2: i32) -> (i32, i32) {
    %c0_i32 = arith.constant 0 : i32
    %c0_i32_0 = arith.constant 0 : i32
    %c0_i32_1 = arith.constant 0 : i32
    return %c0_i32, %c0_i32_0 : i32, i32
  }
  func.func @transform_6(%arg0: i32, %arg1: i32, %arg2: i32) -> (i32, i32) {
    %c0_i32 = arith.constant 0 : i32
    %c0_i32_0 = arith.constant 0 : i32
    %c0_i32_1 = arith.constant 0 : i32
    return %c0_i32, %c0_i32_0 : i32, i32
  }
  func.func @transform_7(%arg0: i32, %arg1: i32, %arg2: i32) -> (i32, i32, i32) {
    %c1_i32 = arith.constant 1 : i32
    %0 = arith.muli %arg0, %c1_i32 : i32
    %1 = arith.addi %0, %arg1 : i32
    %c0_i32 = arith.constant 0 : i32
    %c0_i32_0 = arith.constant 0 : i32
    %c0_i32_1 = arith.constant 0 : i32
    return %1, %c0_i32, %c0_i32_0 : i32, i32, i32
  }
}

</mosaic_0001>

<llo_original>
// kernel: tpu_custom_call.1
$region0: #{tpu_custom_call.1}
  #allocation0 [shape = 'u32[]', space=smem, size = 0x4, offset = 0x4, fixed_abs, tag = 'smem constant byte address 0x4 - core index']
  #allocation1 [shape = 'u32[72,128]{1,0:T(1,128)}', space=vmem, size = 0x9000, scoped, tag = 'internal scratch']
  %s0 = inlined_call_operand.vmem [shape: f32[2,16,3], index: 0, kind: input, shape index: {}]
  %s1 = inlined_call_operand.vmem [shape: bf16[3,64], index: 1, kind: input, shape index: {}]
  %s2 = inlined_call_operand.vmem [shape: f32[1,64], index: 2, kind: input, shape index: {}]
  %s3 = inlined_call_operand.vmem [shape: bf16[64,128], index: 3, kind: input, shape index: {}]
  %s4 = inlined_call_operand.vmem [shape: f32[1,128], index: 4, kind: input, shape index: {}]
  %s5 = inlined_call_operand.hbm [shape: bf16[128,256], index: 5, kind: input, shape index: {}]
  %s6 = inlined_call_operand.vmem [shape: f32[1,256], index: 6, kind: input, shape index: {}]
  %s7 = inlined_call_operand.hbm [shape: f32[2,1,256], index: 7, kind: output, shape index: {}]
  %s8 = sld [smem:[#allocation0]]
  $region69: #{tpu_custom_call.1} parent=0
    _
  %s10 = ssub.s32 1, %s8
  %s11 = scalar_select 0, %s10, %s8
  $region1: #{tpu_custom_call.1} parent=0
    #allocation2 [shape = 'u8[65536]{0}', space=vmem, size = 0x10000, scoped, tag = 'input window, operand 5, single buffered']
    #allocation3 [shape = 's32[2]{0}', space=sflag, size = 0x8, scoped, tag = 'scoped memory for tpu_custom_call.1']
    #allocation4 [shape = 's32[2]{0}', space=sflag, size = 0x8, scoped, tag = 'scoped memory for tpu_custom_call.1']
    #allocation5 [shape = 'u8[2048]{0}', space=vmem, size = 0x800, scoped, tag = 'output window, operand 0']
    %12 = vsyncpa [#allocation3], 0
    %13 = vsyncpa [#allocation4], 0
    %s14 = scalar_lea.sflag [#allocation4], 1
    %15 = vsyncpa %s14, 0
    loop: start=0, step=1, limit=4
    $region2: #{tpu_custom_call.1} parent=1 // loop_pre_header
      _
    $region3: #{tpu_custom_call.1} parent=1 // loop_header
      %s17 = sphi 0, %s21
      %p18 = scmp.ge.s32.totalorder %s17, 4
      %s24 = sphi 0, %s43
      %s25 = sphi 0, %s39
      %s26 = sphi 0, %s35
      %s27 = sphi 0, %s24
      %s28 = sphi 0, %s25
      %s29 = sphi 0, %s26
      %s30 = sphi 0, %s27
      %s31 = sphi 0, %s28
      %s32 = sphi 0, %s29
      %s50 = sphi 0, %s52
      %s53 = sphi 0, %s50
      %s54 = sphi 0, %s53
      %s70 = sphi 0, %s54
      %s74 = sphi 0, %s74
      %s76 = sphi 0, %s74
      %s77 = sphi 0, %s76
      %s91 = sphi 0, %s77
      %s95 = sphi 0, %s95
      %s97 = sphi 0, %s95
      %s98 = sphi 0, %s97
      %s112 = sphi 0, %s98
      %s116 = sphi 0, %s116
      %s118 = sphi 0, %s116
      %s119 = sphi 0, %s118
      %s133 = sphi 0, %s119
      %s137 = sphi 0, %s137
      %s139 = sphi 0, %s137
      %s140 = sphi 0, %s139
      %s154 = sphi 0, %s140
      %s158 = sphi 0, %s158
      %s160 = sphi 0, %s158
      %s161 = sphi 0, %s160
      %s175 = sphi 0, %s161
      %s179 = sphi 0, %s179
      %s181 = sphi 0, %s179
      %s182 = sphi 0, %s181
      %s196 = sphi 0, %s182
      %s204 = sphi 0, %s206
      %s207 = sphi 0, %s204
      %s208 = sphi 0, %s207
      %s224 = sphi 0, %s208
    $region4: #{tpu_custom_call.1} parent=1 // loop_header_branch
      %20 = sbr.rel (%p18) target = $region8
    $region5: #{tpu_custom_call.1} parent=1 // loop_body
      %s22 = ssub.s32 %s17, 1
      %s23 = ssub.s32 %s17, 2
      %s33 = sadd.s32 1, %s26
      %p34 = scmp.ge.s32.totalorder %s33, 1
      %s35 = scalar_select %p34, 0, %s33
      %s36 = sadd.s32 1, %s25
      %s37 = scalar_select %p34, %s36, %s25
      %p38 = scmp.ge.s32.totalorder %s37, 1
      %s39 = scalar_select %p38, 0, %s37
      %s40 = sadd.s32 1, %s24
      %s41 = scalar_select %p38, %s40, %s24
      %p42 = scmp.ge.s32.totalorder %s41, 2
      %s43 = scalar_select %p42, 0, %s41
      %s44 = sadd.s32 %s25, %s26
      %s45 = sadd.s32 %s39, %s35
      %s46 = ssub.s32 %s24, %s43
      %s47 = ssub.s32 %s44, %s45
      %s48 = sor.u32 %s46, %s47
      %p49 = scmp.eq.s32.totalorder %s48, 0
      %s51 = sadd.s32 %s50, 1
      %s52 = scalar_select %p49, %s50, %s51
      %p55 = pneg %p49
      %p56 = scmp.eq.s32.totalorder %s17, 1
      %p57 = por %p55, %p56
      %p58 = scmp.ne.s32.totalorder %s50, %s53
      %p59 = scmp.eq.s32.totalorder %s17, 0
      %p60 = por %p58, %p59
      %p61 = scmp.ne.s32.totalorder %s50, %s53
      %p62 = scmp.eq.s32.totalorder %s22, 1
      %p63 = por %p61, %p62
      %p64 = scmp.ne.s32.totalorder %s53, %s54
      %p65 = scmp.eq.s32.totalorder %s22, 0
      %p66 = por %p64, %p65
      %p67 = scmp.ne.s32.totalorder %s53, %s54
      %p68 = scmp.eq.s32.totalorder %s23, 1
      %p69 = por %p67, %p68
      %p71 = scmp.ne.s32.totalorder %s54, %s70
      %p72 = scmp.eq.s32.totalorder %s23, 0
      %p73 = por %p71, %p72
      %s75 = sadd.s32 %s74, 1
      %p78 = scmp.eq.s32.totalorder %s17, 1
      %p79 = scmp.ne.s32.totalorder %s74, %s76
      %p80 = scmp.eq.s32.totalorder %s17, 0
      %p81 = por %p79, %p80
      %p82 = scmp.ne.s32.totalorder %s74, %s76
      %p83 = scmp.eq.s32.totalorder %s22, 1
      %p84 = por %p82, %p83
      %p85 = scmp.ne.s32.totalorder %s76, %s77
      %p86 = scmp.eq.s32.totalorder %s22, 0
      %p87 = por %p85, %p86
      %p88 = scmp.ne.s32.totalorder %s76, %s77
      %p89 = scmp.eq.s32.totalorder %s23, 1
      %p90 = por %p88, %p89
      %p92 = scmp.ne.s32.totalorder %s77, %s91
      %p93 = scmp.eq.s32.totalorder %s23, 0
      %p94 = por %p92, %p93
      %s96 = sadd.s32 %s95, 1
      %p99 = scmp.eq.s32.totalorder %s17, 1
      %p100 = scmp.ne.s32.totalorder %s95, %s97
      %p101 = scmp.eq.s32.totalorder %s17, 0
      %p102 = por %p100, %p101
      %p103 = scmp.ne.s32.totalorder %s95, %s97
      %p104 = scmp.eq.s32.totalorder %s22, 1
      %p105 = por %p103, %p104
      %p106 = scmp.ne.s32.totalorder %s97, %s98
      %p107 = scmp.eq.s32.totalorder %s22, 0
      %p108 = por %p106, %p107
      %p109 = scmp.ne.s32.totalorder %s97, %s98
      %p110 = scmp.eq.s32.totalorder %s23, 1
      %p111 = por %p109, %p110
      %p113 = scmp.ne.s32.totalorder %s98, %s112
      %p114 = scmp.eq.s32.totalorder %s23, 0
      %p115 = por %p113, %p114
      %s117 = sadd.s32 %s116, 1
      %p120 = scmp.eq.s32.totalorder %s17, 1
      %p121 = scmp.ne.s32.totalorder %s116, %s118
      %p122 = scmp.eq.s32.totalorder %s17, 0
      %p123 = por %p121, %p122
      %p124 = scmp.ne.s32.totalorder %s116, %s118
      %p125 = scmp.eq.s32.totalorder %s22, 1
      %p126 = por %p124, %p125
      %p127 = scmp.ne.s32.totalorder %s118, %s119
      %p128 = scmp.eq.s32.totalorder %s22, 0
      %p129 = por %p127, %p128
      %p130 = scmp.ne.s32.totalorder %s118, %s119
      %p131 = scmp.eq.s32.totalorder %s23, 1
      %p132 = por %p130, %p131
      %p134 = scmp.ne.s32.totalorder %s119, %s133
      %p135 = scmp.eq.s32.totalorder %s23, 0
      %p136 = por %p134, %p135
      %s138 = sadd.s32 %s137, 1
      %p141 = scmp.eq.s32.totalorder %s17, 1
      %p142 = scmp.ne.s32.totalorder %s137, %s139
      %p143 = scmp.eq.s32.totalorder %s17, 0
      %p144 = por %p142, %p143
      %p145 = scmp.ne.s32.totalorder %s137, %s139
      %p146 = scmp.eq.s32.totalorder %s22, 1
      %p147 = por %p145, %p146
      %p148 = scmp.ne.s32.totalorder %s139, %s140
      %p149 = scmp.eq.s32.totalorder %s22, 0
      %p150 = por %p148, %p149
      %p151 = scmp.ne.s32.totalorder %s139, %s140
      %p152 = scmp.eq.s32.totalorder %s23, 1
      %p153 = por %p151, %p152
      %p155 = scmp.ne.s32.totalorder %s140, %s154
      %p156 = scmp.eq.s32.totalorder %s23, 0
      %p157 = por %p155, %p156
      %s159 = sadd.s32 %s158, 1
      %p162 = scmp.eq.s32.totalorder %s17, 1
      %p163 = scmp.ne.s32.totalorder %s158, %s160
      %p164 = scmp.eq.s32.totalorder %s17, 0
      %p165 = por %p163, %p164
      %p166 = scmp.ne.s32.totalorder %s158, %s160
      %p167 = scmp.eq.s32.totalorder %s22, 1
      %p168 = por %p166, %p167
      %p169 = scmp.ne.s32.totalorder %s160, %s161
      %p170 = scmp.eq.s32.totalorder %s22, 0
      %p171 = por %p169, %p170
      %p172 = scmp.ne.s32.totalorder %s160, %s161
      %p173 = scmp.eq.s32.totalorder %s23, 1
      %p174 = por %p172, %p173
      %p176 = scmp.ne.s32.totalorder %s161, %s175
      %p177 = scmp.eq.s32.totalorder %s23, 0
      %p178 = por %p176, %p177
      %s180 = sadd.s32 %s179, 1
      %p183 = scmp.eq.s32.totalorder %s17, 1
      %p184 = scmp.ne.s32.totalorder %s179, %s181
      %p185 = scmp.eq.s32.totalorder %s17, 0
      %p186 = por %p184, %p185
      %p187 = scmp.ne.s32.totalorder %s179, %s181
      %p188 = scmp.eq.s32.totalorder %s22, 1
      %p189 = por %p187, %p188
      %p190 = scmp.ne.s32.totalorder %s181, %s182
      %p191 = scmp.eq.s32.totalorder %s22, 0
      %p192 = por %p190, %p191
      %p193 = scmp.ne.s32.totalorder %s181, %s182
      %p194 = scmp.eq.s32.totalorder %s23, 1
      %p195 = por %p193, %p194
      %p197 = scmp.ne.s32.totalorder %s182, %s196
      %p198 = scmp.eq.s32.totalorder %s23, 0
      %p199 = por %p197, %p198
      %s200 = sadd.s32 %s24, %s25
      %s201 = sadd.s32 %s43, %s39
      %s202 = ssub.s32 %s200, %s201
      %p203 = scmp.eq.s32.totalorder %s202, 0
      %s205 = sadd.s32 %s204, 1
      %s206 = scalar_select %p203, %s204, %s205
      %p209 = pneg %p203
      %p210 = scmp.eq.s32.totalorder %s17, 1
      %p211 = por %p209, %p210
      %p212 = scmp.ne.s32.totalorder %s204, %s207
      %p213 = scmp.eq.s32.totalorder %s17, 0
      %p214 = por %p212, %p213
      %p215 = scmp.ne.s32.totalorder %s204, %s207
      %p216 = scmp.eq.s32.totalorder %s22, 1
      %p217 = por %p215, %p216
      %p218 = scmp.ne.s32.totalorder %s207, %s208
      %p219 = scmp.eq.s32.totalorder %s22, 0
      %p220 = por %p218, %p219
      %p221 = scmp.ne.s32.totalorder %s207, %s208
      %p222 = scmp.eq.s32.totalorder %s23, 1
      %p223 = por %p221, %p222
      %p225 = scmp.ne.s32.totalorder %s208, %s224
      %p226 = scmp.eq.s32.totalorder %s23, 0
      %p227 = por %p225, %p226
      %p228 = scmp.le.s32.totalorder 1, %s17
      %p229 = scmp.lt.s32.totalorder %s17, 3
      %p230 = pnand %p228, %p229
      %p231 = pneg %p230
      // Predicated region
      $region9: #{tpu_custom_call.1} parent=5 // pred_check
        _
      $region10: #{tpu_custom_call.1} parent=5 // pred_check_branch
        %233 = sbr.rel (%p230) target = $region12
      $region11: #{tpu_custom_call.1} parent=5 // pred_region
        %s234 = ssub.s32 %s17, 1
        // Predicated region
        $region13: #{tpu_custom_call.1} parent=11 // pred_check
          %p235 = pneg %p87
        $region14: #{tpu_custom_call.1} parent=11 // pred_check_branch
          %237 = sbr.rel (%p235) target = $region16
        $region15: #{tpu_custom_call.1} parent=11 // pred_region
          _
        $region16: #{tpu_custom_call.1} parent=11 // pred_fallthru
          _
        // Predicated region
        $region17: #{tpu_custom_call.1} parent=11 // pred_check
          %p238 = pneg %p108
        $region18: #{tpu_custom_call.1} parent=11 // pred_check_branch
          %240 = sbr.rel (%p238) target = $region20
        $region19: #{tpu_custom_call.1} parent=11 // pred_region
          _
        $region20: #{tpu_custom_call.1} parent=11 // pred_fallthru
          _
        // Predicated region
        $region21: #{tpu_custom_call.1} parent=11 // pred_check
          %p241 = pneg %p129
        $region22: #{tpu_custom_call.1} parent=11 // pred_check_branch
          %243 = sbr.rel (%p241) target = $region24
        $region23: #{tpu_custom_call.1} parent=11 // pred_region
          _
        $region24: #{tpu_custom_call.1} parent=11 // pred_fallthru
          _
        // Predicated region
        $region25: #{tpu_custom_call.1} parent=11 // pred_check
          %p244 = pneg %p150
        $region26: #{tpu_custom_call.1} parent=11 // pred_check_branch
          %246 = sbr.rel (%p244) target = $region28
        $region27: #{tpu_custom_call.1} parent=11 // pred_region
          _
        $region28: #{tpu_custom_call.1} parent=11 // pred_fallthru
          _
        // Predicated region
        $region29: #{tpu_custom_call.1} parent=11 // pred_check
          %p247 = pneg %p171
        $region30: #{tpu_custom_call.1} parent=11 // pred_check_branch
          %249 = sbr.rel (%p247) target = $region32
        $region31: #{tpu_custom_call.1} parent=11 // pred_region
          %251 = vsyncadd [#allocation3], 0
          %s252 = sshll.u32 %s5, 4
          %s253 = int_to_ptr.hbm [resolvable:$true] %s252
          %s254 = sshll.u32 [#allocation2], 4
          %s255 = int_to_ptr.vmem [resolvable:$true] %s254
          %260 = dma.hbm_to_vmem [thread:$0]  %s253, 2048, %s255, [#allocation3], 128, 128, 8
        $region32: #{tpu_custom_call.1} parent=11 // pred_fallthru
          _
        // Predicated region
        $region33: #{tpu_custom_call.1} parent=11 // pred_check
          %p261 = pneg %p192
        $region34: #{tpu_custom_call.1} parent=11 // pred_check_branch
          %263 = sbr.rel (%p261) target = $region36
        $region35: #{tpu_custom_call.1} parent=11 // pred_region
          _
        $region36: #{tpu_custom_call.1} parent=11 // pred_fallthru
          _
      $region12: #{tpu_custom_call.1} parent=5 // pred_fallthru
        _
      %p264 = scmp.lt.s32.totalorder %s17, 2
      // Predicated region
      $region37: #{tpu_custom_call.1} parent=5 // pred_check
        %p265 = pneg %p264
      $region38: #{tpu_custom_call.1} parent=5 // pred_check_branch
        %267 = sbr.rel (%p265) target = $region40
      $region39: #{tpu_custom_call.1} parent=5 // pred_region
        // Predicated region
        $region41: #{tpu_custom_call.1} parent=39 // pred_check
          %p268 = pneg %p60
        $region42: #{tpu_custom_call.1} parent=39 // pred_check_branch
          %270 = sbr.rel (%p268) target = $region44
        $region43: #{tpu_custom_call.1} parent=39 // pred_region
          %s271 = sadd.s32 %s25, %s26
          %s272 = smul.u32 2, %s271
          %p273 = scmp.lt.s32.totalorder %s24, 1
          %s274 = scalar_select %p273, %s24, 1
          %p275 = scmp.lt.s32.totalorder %s272, 1
          %s276 = scalar_select %p275, %s272, 1
          %s277 = smul.addr %s274, 2
          %s278 = sadd.s32 %s276, %s277
          %s279 = smul.addr %s278, 8
          %s280 = scalar_lea.vmem %s0, %s279
          %s281 = sadd.s32 %s25, %s26
          %s282 = smul.u32 2, %s281
        $region44: #{tpu_custom_call.1} parent=39 // pred_fallthru
          _
      $region40: #{tpu_custom_call.1} parent=5 // pred_fallthru
        _
      %p283 = scmp.le.s32.totalorder 1, %s17
      %p284 = scmp.lt.s32.totalorder %s17, 3
      %p285 = pnand %p283, %p284
      %p286 = pneg %p285
      // Predicated region
      $region45: #{tpu_custom_call.1} parent=5 // pred_check
        _
      $region46: #{tpu_custom_call.1} parent=5 // pred_check_branch
        %288 = sbr.rel (%p285) target = $region48
      $region47: #{tpu_custom_call.1} parent=5 // pred_region
        %s289 = ssub.s32 %s17, 1
        // Predicated region
        $region49: #{tpu_custom_call.1} parent=47 // pred_check
          %p290 = pneg %p171
        $region50: #{tpu_custom_call.1} parent=47 // pred_check_branch
          %292 = sbr.rel (%p290) target = $region52
        $region51: #{tpu_custom_call.1} parent=47 // pred_region
          %294 = dma.done [#allocation3], 2048
        $region52: #{tpu_custom_call.1} parent=47 // pred_fallthru
          _
        %s295 = sadd.s32 %s28, %s29
        %s296 = smul.u32 2, %s295
        %p297 = scmp.lt.s32.totalorder %s27, 1
        %s298 = scalar_select %p297, %s27, 1
        %p299 = scmp.lt.s32.totalorder %s296, 1
        %s300 = scalar_select %p299, %s296, 1
        %s301 = smul.addr %s298, 2
        %s302 = sadd.s32 %s300, %s301
        %s303 = smul.addr %s302, 8
        %s304 = scalar_lea.vmem %s0, %s303
        %p305 = pneg %p66
        %p306 = pneg %p63
        %p307 = pneg %p87
        %p308 = pneg %p84
        %p309 = pneg %p108
        %p310 = pneg %p105
        %p311 = pneg %p129
        %p312 = pneg %p126
        %p313 = pneg %p150
        %p314 = pneg %p147
        %p315 = pneg %p171
        %p316 = pneg %p168
        %p317 = pneg %p192
        %p318 = pneg %p189
        %p319 = pneg %p220
        %p320 = pneg %p217
        %s321 = sand.u32 %s207, 1
        %s322 = scalar_lea.sflag [#allocation4], %s321
        %s323 = sand.u32 %s207, 1
        %s324 = smul.addr %s323, 2
        %s325 = scalar_lea.vmem [#allocation5], %s324
        %s326 = sadd.s32 %s28, %s29
        %s327 = smul.u32 2, %s326
        %p328 = scmp.lt.s32.totalorder %s27, 1
        %s329 = scalar_select %p328, %s27, 1
        %p330 = scmp.lt.s32.totalorder %s327, 1
        %s331 = scalar_select %p330, %s327, 1
        %s332 = smul.addr %s329, 2
        %s333 = sadd.s32 %s331, %s332
        %s334 = smul.addr %s333, 8
        %s335 = scalar_lea.vmem %s0, %s334
        %s336 = sadd.s32 %s28, %s29
        %s337 = smul.u32 2, %s336
        %s338 = sadd.s32 %s27, %s28
        %p340 = scmp.eq.s32.totalorder %s29, 0
        // Predicated region
        $region53: #{tpu_custom_call.1} parent=47 // pred_check
          %p341 = pneg %p340
        $region54: #{tpu_custom_call.1} parent=47 // pred_check_branch
          %343 = sbr.rel (%p341) target = $region56
        $region55: #{tpu_custom_call.1} parent=47 // pred_region
          %v344 = vlaneseq
          %vm345 = vcmp.ge.s32.totalorder %v344, 0
          %vm346 = vcmp.lt.s32.totalorder %v344, 256
          %vm347 = vmand %vm345, %vm346
          %348 = vst.msk [vmem:[%s325] sm:$0x3] %vm347, -inf
        $region56: #{tpu_custom_call.1} parent=47 // pred_fallthru
          _
        %v349 = vld [vmem:[%s335] sm:$0xff]
        %v350 = vld [vmem:[%s335 + $0x8] sm:$0xff]
        %v351 = vpack.c.bf16 %v350, %v349
        %v352 = vld [vmem:[%s1] sm:$0x3]
        %v353 = vld [vmem:[%s2] sm:$0x1]
        %v355 = vperm.slane %v353, 0
        %vm357 = vcmask 23552
        %v359 = vsel %vm357, %v351, 0
        %vm361 = vcmask 1040384
        %vm362 = vcmask 1041408
        %v363 = vsel %vm361, 4294967295, 65535
        %v364 = vsel %vm362, %v363, 0
        %v366 = vand.u32 %v352, %v364
        %368 = vmatpush.bf16.msra.mxu0 0
        %369 = vmatpush.bf16.msra.mxu0 0
        %370 = vmatpush.bf16.msra.mxu0 0
        %371 = vmatpush.bf16.msra.mxu0 0
        %372 = vmatpush.bf16.msra.mxu0 0
        %373 = vmatpush.bf16.msra.mxu0 0
        %374 = vmatpush.bf16.msra.mxu0 0
        %375 = vmatpush.bf16.msra.mxu0 %v366
        %376 = vmatmul.bf16.gmra.mxu0 %v359
        %v377 = vpop.f32.mrf.mxu0
        %v378 = vadd.f32 %v355, %v377
        %v379 = vpop.f32.mrf.mxu0
        %v380 = vadd.f32 %v355, %v379
        %381 = vdwg.mxu0
        %v382 = vmax.f32 %v378, 0.0
        %v383 = vmax.f32 %v380, 0.0
        %v384 = vpack.c.bf16 %v383, %v382
        %v385 = vld [vmem:[%s3] sm:$0xf]
        %v386 = vld [vmem:[%s3 + $0x4] sm:$0xf]
        %v387 = vld [vmem:[%s3 + $0x8] sm:$0xf]
        %v388 = vld [vmem:[%s3 + $0xc] sm:$0xf]
        %v389 = vld [vmem:[%s3 + $0x10] sm:$0xf]
        %v390 = vld [vmem:[%s3 + $0x14] sm:$0xf]
        %v391 = vld [vmem:[%s3 + $0x18] sm:$0xf]
        %v392 = vld [vmem:[%s3 + $0x1c] sm:$0xf]
        %v393 = vld [vmem:[%s4] sm:$0x1]
        %v395 = vperm.slane %v393, 0
        %v405 = vunpack.c.l.b16 %v385
        %v406 = vunpack.c.l.b16 %v386
        %v407 = vunpack.c.l.b16 %v387
        %v408 = vunpack.c.l.b16 %v388
        %v409 = vunpack.c.l.b16 %v389
        %v410 = vunpack.c.l.b16 %v390
        %v411 = vunpack.c.l.b16 %v391
        %v412 = vunpack.c.l.b16 %v392
        %v413 = vpack.c.b16 %v406, %v405
        %v414 = vpack.c.b16 %v408, %v407
        %v415 = vpack.c.b16 %v410, %v409
        %v416 = vpack.c.b16 %v412, %v411
        %vm421 = vcmask 523264
        %v423 = vsel %vm421, %v384, 0
        %425 = vmatpush.bf16.msra.mxu0 0
        %426 = vmatpush.bf16.msra.mxu0 0
        %427 = vmatpush.bf16.msra.mxu0 0
        %428 = vmatpush.bf16.msra.mxu0 0
        %429 = vmatpush.bf16.msra.mxu0 %v416
        %430 = vmatpush.bf16.msra.mxu0 %v415
        %431 = vmatpush.bf16.msra.mxu0 %v414
        %432 = vmatpush.bf16.msra.mxu0 %v413
        %433 = vmatmul.bf16.gmra.mxu0 %v423
        %v434 = vpop.f32.mrf.mxu0
        %v435 = vadd.f32 %v395, %v434
        %v436 = vpop.f32.mrf.mxu0
        %v437 = vadd.f32 %v395, %v436
        %438 = vdwg.mxu0
        %v439 = vmax.f32 %v435, 0.0
        %v440 = vmax.f32 %v437, 0.0
        %v441 = vpack.c.bf16 %v440, %v439
        %v442 = vld [vmem:[#allocation2] sm:$0xff]
        %v443 = vld [vmem:[#allocation2 + $0x8] sm:$0xff]
        %v444 = vld [vmem:[#allocation2 + $0x10] sm:$0xff]
        %v445 = vld [vmem:[#allocation2 + $0x18] sm:$0xff]
        %v446 = vld [vmem:[#allocation2 + $0x20] sm:$0xff]
        %v447 = vld [vmem:[#allocation2 + $0x28] sm:$0xff]
        %v448 = vld [vmem:[#allocation2 + $0x30] sm:$0xff]
        %v449 = vld [vmem:[#allocation2 + $0x38] sm:$0xff]
        %v450 = vld [vmem:[#allocation2 + $0x40] sm:$0xff]
        %v451 = vld [vmem:[#allocation2 + $0x48] sm:$0xff]
        %v452 = vld [vmem:[#allocation2 + $0x50] sm:$0xff]
        %v453 = vld [vmem:[#allocation2 + $0x58] sm:$0xff]
        %v454 = vld [vmem:[#allocation2 + $0x60] sm:$0xff]
        %v455 = vld [vmem:[#allocation2 + $0x68] sm:$0xff]
        %v456 = vld [vmem:[#allocation2 + $0x70] sm:$0xff]
        %v457 = vld [vmem:[#allocation2 + $0x78] sm:$0xff]
        %v458 = vld [vmem:[%s6] sm:$0x3]
        %v460 = vperm.slane %v458, 0
        %v461 = vperm.slane %v458, 1
        %v480 = vunpack.c.l.b16 %v442
        %v481 = vunpack.c.h.b16 %v442
        %v482 = vunpack.c.l.b16 %v443
        %v483 = vunpack.c.h.b16 %v443
        %v484 = vunpack.c.l.b16 %v444
        %v485 = vunpack.c.h.b16 %v444
        %v486 = vunpack.c.l.b16 %v445
        %v487 = vunpack.c.h.b16 %v445
        %v488 = vunpack.c.l.b16 %v446
        %v489 = vunpack.c.h.b16 %v446
        %v490 = vunpack.c.l.b16 %v447
        %v491 = vunpack.c.h.b16 %v447
        %v492 = vunpack.c.l.b16 %v448
        %v493 = vunpack.c.h.b16 %v448
        %v494 = vunpack.c.l.b16 %v449
        %v495 = vunpack.c.h.b16 %v449
        %v496 = vunpack.c.l.b16 %v450
        %v497 = vunpack.c.h.b16 %v450
        %v498 = vunpack.c.l.b16 %v451
        %v499 = vunpack.c.h.b16 %v451
        %v500 = vunpack.c.l.b16 %v452
        %v501 = vunpack.c.h.b16 %v452
        %v502 = vunpack.c.l.b16 %v453
        %v503 = vunpack.c.h.b16 %v453
        %v504 = vunpack.c.l.b16 %v454
        %v505 = vunpack.c.h.b16 %v454
        %v506 = vunpack.c.l.b16 %v455
        %v507 = vunpack.c.h.b16 %v455
        %v508 = vunpack.c.l.b16 %v456
        %v509 = vunpack.c.h.b16 %v456
        %v510 = vunpack.c.l.b16 %v457
        %v511 = vunpack.c.h.b16 %v457
        %v512 = vpack.c.b16 %v482, %v480
        %v513 = vpack.c.b16 %v483, %v481
        %v514 = vpack.c.b16 %v486, %v484
        %v515 = vpack.c.b16 %v487, %v485
        %v516 = vpack.c.b16 %v490, %v488
        %v517 = vpack.c.b16 %v491, %v489
        %v518 = vpack.c.b16 %v494, %v492
        %v519 = vpack.c.b16 %v495, %v493
        %v520 = vpack.c.b16 %v498, %v496
        %v521 = vpack.c.b16 %v499, %v497
        %v522 = vpack.c.b16 %v502, %v500
        %v523 = vpack.c.b16 %v503, %v501
        %v524 = vpack.c.b16 %v506, %v504
        %v525 = vpack.c.b16 %v507, %v505
        %v526 = vpack.c.b16 %v510, %v508
        %v527 = vpack.c.b16 %v511, %v509
        %544 = vmatpush.bf16.msra.mxu0 %v526
        %545 = vmatpush.bf16.msra.mxu0 %v524
        %546 = vmatpush.bf16.msra.mxu0 %v522
        %547 = vmatpush.bf16.msra.mxu0 %v520
        %548 = vmatpush.bf16.msra.mxu0 %v518
        %549 = vmatpush.bf16.msra.mxu0 %v516
        %550 = vmatpush.bf16.msra.mxu0 %v514
        %551 = vmatpush.bf16.msra.mxu0 %v512
        %552 = vmatmul.bf16.gmra.mxu0 %v441
        %v553 = vpop.f32.mrf.mxu0
        %v554 = vadd.f32 %v460, %v553
        %v555 = vpop.f32.mrf.mxu0
        %v556 = vadd.f32 %v460, %v555
        %557 = vdwg.mxu0
        %558 = vmatpush.bf16.msra.mxu0 %v527
        %559 = vmatpush.bf16.msra.mxu0 %v525
        %560 = vmatpush.bf16.msra.mxu0 %v523
        %561 = vmatpush.bf16.msra.mxu0 %v521
        %562 = vmatpush.bf16.msra.mxu0 %v519
        %563 = vmatpush.bf16.msra.mxu0 %v517
        %564 = vmatpush.bf16.msra.mxu0 %v515
        %565 = vmatpush.bf16.msra.mxu0 %v513
        %566 = vmatmul.bf16.gmra.mxu0 %v441
        %v567 = vpop.f32.mrf.mxu0
        %v568 = vadd.f32 %v461, %v567
        %v569 = vpop.f32.mrf.mxu0
        %v570 = vadd.f32 %v461, %v569
        %571 = vdwg.mxu0
        %v572 = vmax.f32 %v554, 0.0
        %v573 = vmax.f32 %v568, 0.0
        %v574 = vmax.f32 %v556, 0.0
        %v575 = vmax.f32 %v570, 0.0
        %v576 = vld [vmem:[%s325] sm:$0x3]
        %v577 = vmax.f32 %v572, %v574
        %v578 = vrot.slane %v577, 4
        %v579 = vmax.f32 %v577, %v578
        %v580 = vrot.slane %v579, 2
        %v581 = vmax.f32 %v579, %v580
        %v582 = vrot.slane %v581, 1
        %v583 = vmax.f32 %v581, %v582
        %v584 = vmax.f32 %v573, %v575
        %v585 = vrot.slane %v584, 4
        %v586 = vmax.f32 %v584, %v585
        %v587 = vrot.slane %v586, 2
        %v588 = vmax.f32 %v586, %v587
        %v589 = vrot.slane %v588, 1
        %v590 = vmax.f32 %v588, %v589
        %v593 = vrot.slane %v590, 7
        %v594 = vsel %vm361, %v583, %v593
        %v596 = vmax.f32 %v576, %v594
        %v597 = vlaneseq
        %vm598 = vcmp.ge.s32.totalorder %v597, 0
        %vm599 = vcmp.lt.s32.totalorder %v597, 256
        %vm600 = vmand %vm598, %vm599
        %601 = vst.msk [vmem:[%s325] sm:$0x3] %vm600, %v596
        %s602 = sand.u32 %s207, 1
        %s603 = scalar_lea.sflag [#allocation4], %s602
        %s604 = sand.u32 %s207, 1
        %s605 = smul.addr %s604, 2
        %s606 = scalar_lea.vmem [#allocation5], %s605
        // Predicated region
        $region57: #{tpu_custom_call.1} parent=47 // pred_check
          %p607 = pneg %p217
        $region58: #{tpu_custom_call.1} parent=47 // pred_check_branch
          %609 = sbr.rel (%p607) target = $region60
        $region59: #{tpu_custom_call.1} parent=47 // pred_region
          %s610 = sadd.s32 %s27, %s28
          %612 = vsyncadd %s603, 0
          %s613 = smul.addr %s610, 2
          %s614 = scalar_lea.hbm %s7, %s613
          %s616 = sshll.u32 %s606, 4
          %s617 = int_to_ptr.vmem [resolvable:$true] %s616
          %s618 = sshll.u32 %s614, 4
          %s619 = int_to_ptr.hbm [resolvable:$true] %s618
          %621 = dma.vmem_to_hbm [thread:$0]  %s617, 32, %s619, %s603
        $region60: #{tpu_custom_call.1} parent=47 // pred_fallthru
          _
      $region48: #{tpu_custom_call.1} parent=5 // pred_fallthru
        _
      %p622 = scmp.le.s32.totalorder 2, %s17
      // Predicated region
      $region61: #{tpu_custom_call.1} parent=5 // pred_check
        %p623 = pneg %p622
      $region62: #{tpu_custom_call.1} parent=5 // pred_check_branch
        %625 = sbr.rel (%p623) target = $region64
      $region63: #{tpu_custom_call.1} parent=5 // pred_region
        %s626 = ssub.s32 %s17, 2
        // Predicated region
        $region65: #{tpu_custom_call.1} parent=63 // pred_check
          %p627 = pneg %p223
        $region66: #{tpu_custom_call.1} parent=63 // pred_check_branch
          %629 = sbr.rel (%p627) target = $region68
        $region67: #{tpu_custom_call.1} parent=63 // pred_region
          %s630 = sand.u32 %s208, 1
          %s631 = scalar_lea.sflag [#allocation4], %s630
          %s632 = sand.u32 %s208, 1
          %s633 = smul.addr %s632, 2
          %s634 = scalar_lea.vmem [#allocation5], %s633
          %636 = dma.done %s631, 32
        $region68: #{tpu_custom_call.1} parent=63 // pred_fallthru
          _
      $region64: #{tpu_custom_call.1} parent=5 // pred_fallthru
        _
    $region6: #{tpu_custom_call.1} parent=1 // loop_footer
      %s21 = sadd.s32 1, %s17
    $region7: #{tpu_custom_call.1} parent=1 // loop_footer_branch
      %16 = sbr.rel target = $region3
    $region8: #{tpu_custom_call.1} parent=1 // loop_exit
      _
    %637 = vsyncpa [#allocation3], 1
    %s638 = scalar_lea.sflag [#allocation3], 1
    %639 = vsyncpa %s638, 1
    %640 = vsyncpa [#allocation4], 1
    %s641 = scalar_lea.sflag [#allocation4], 1
    %642 = vsyncpa %s641, 1

</llo_original>
